<compile_context>
chip_gen: v5e
topology: v5e:2x2
jax: 0.10.0
libtpu: 0.0.40
codegen_flags: <defaults>
</compile_context>

<pallas_src>
import functools

import jax
import jax.numpy as jnp
from jax.experimental import pallas as pl
from jax.experimental.pallas import tpu as pltpu


# ---------------------------------------------------------------------------
# Fused kernel: per batch element b
#   mean(HW) -> 1x1 conv + folded BN (both branches) -> concat ->
#   qkv linear -> head-axis softmax attention (n == 1) -> proj linear ->
#   out = (1 + fuse_s) * s + (1 + fuse_c) * c
# ---------------------------------------------------------------------------
def _afd_fused_kernel(s_ref, c_ref, ws_ref, shs_ref, wc_ref, shc_ref,
                      wqkv_ref, wproj_ref, bproj_ref, hmat_ref, out_ref,
                      *, h, dh, cs, cc, scale):
    d = cs + cc
    s = s_ref[0]                                         # (Cs, HW) f32
    c = c_ref[0]                                         # (Cc, HW) f32

    # ---- ChannelAtt: global mean + 1x1 conv (bias=False) + folded BN -------
    # bn_scale and 1/HW are pre-folded into ws/wc, so: sum_HW -> dot -> +shift.
    s_sum = jnp.sum(s, axis=1, keepdims=True)            # (Cs, 1)
    c_sum = jnp.sum(c, axis=1, keepdims=True)            # (Cc, 1)
    s_att = jnp.dot(s_sum.T, ws_ref[...],
                    preferred_element_type=jnp.float32) + shs_ref[...]  # (1, Cs)
    c_att = jnp.dot(c_sum.T, wc_ref[...],
                    preferred_element_type=jnp.float32) + shc_ref[...]  # (1, Cc)
    sc = jnp.concatenate([s_att, c_att], axis=1)         # (1, D)

    # ---- qkv linear + per-head softmax attention (seq len n == 1) ----------
    qkv = jnp.dot(sc, wqkv_ref[...],
                  preferred_element_type=jnp.float32)    # (1, 3D)
    q = qkv[:, 0:d]
    k = qkv[:, d:2 * d]
    v = qkv[:, 2 * d:3 * d]

    # k.softmax(dim=1) == softmax over the head axis.  Layout is head-major on
    # the lanes: head i occupies lanes [i*dh, (i+1)*dh).  Max / denominator
    # over the heads are computed with unrolled static head slices (kept
    # lane-resident) and broadcast back with a lane concat.
    k_heads = [k[:, i * dh:(i + 1) * dh] for i in range(h)]      # h x (1, dh)
    k_max = k_heads[0]
    for t in k_heads[1:]:
        k_max = jnp.maximum(k_max, t)                            # (1, dh)
    k_exp = jnp.exp(k - jnp.concatenate([k_max] * h, axis=1))    # (1, D)
    e_heads = [k_exp[:, i * dh:(i + 1) * dh] for i in range(h)]
    den = e_heads[0]
    for t in e_heads[1:]:
        den = den + t                                            # (1, dh)
    k_soft = k_exp / jnp.concatenate([den] * h, axis=1)          # (1, D)

    # With n == 1 the two einsums collapse:
    #   fuse[b,i,j] = scale * (sum_j' q[b,i,j'] * ksoft[b,i,j']) * v[b,i,j]
    # The per-head sum (and its broadcast back over that head's lanes) is a
    # single matmul against the static head-indicator matrix -> stays on MXU.
    alpha = jnp.dot(q * k_soft, hmat_ref[...],
                    preferred_element_type=jnp.float32)          # (1, D)
    fuse = (scale * alpha) * v                                   # (1, D), head-major

    fw = jnp.dot(fuse, wproj_ref[...],
                 preferred_element_type=jnp.float32) + bproj_ref[...]   # (1, D)
    # TODO(synk): proj_drop (nn.Dropout p=0.1) is identity in eval mode;
    # training-mode dropout RNG is not implemented.

    # ---- final fuse: out = (1 + fuse_s) * s + (1 + fuse_c) * c --------------
    fs = fw[:, 0:cs].T                                   # (Cs, 1), broadcast over HW
    fc = fw[:, d - cc:d].T                               # (Cc, 1)
    out_ref[0] = (1.0 + fs) * s + (1.0 + fc) * c


# ---------------------------------------------------------------------------
# AFD forward wrapper (trace-time constant folding + one pallas_call)
# ---------------------------------------------------------------------------
def afd_forward(sp_feat, co_feat, params, h=8):
    B, Cs, H, W = sp_feat.shape
    Cc = co_feat.shape[1]
    D = Cs + Cc
    HW = H * W
    dh = D // h
    f32 = jnp.float32

    # (B, C, H*W): channels on sublanes, flattened spatial (lane-dense) on lanes.
    s_flat = sp_feat.reshape(B, Cs, HW)
    c_flat = co_feat.reshape(B, Cc, HW)

    # Fold BN scale (per output channel) and the 1/HW of the spatial mean into
    # the 1x1-conv weights (done once at trace time, free).
    ws = (params["s_conv_w"] * params["s_bn_scale"]) * (1.0 / HW)
    wc = (params["c_conv_w"] * params["c_bn_scale"]) * (1.0 / HW)

    # Static head-indicator matrix: hmat[d, d'] = 1 iff d, d' are in same head.
    head_id = jnp.arange(D, dtype=jnp.int32) // dh
    hmat = (head_id[:, None] == head_id[None, :]).astype(f32)

    kern = functools.partial(_afd_fused_kernel, h=h, dh=dh, cs=Cs, cc=Cc,
                             scale=float(h) ** (-0.5))

    # TODO(synk): for production-sized C/HW, tile HW in multiples of 128 with a
    # mean-accumulation pass and budget VMEM for v7x's 64 MiB; at these shapes
    # a full-spatial block per batch fits comfortably.  bf16 I/O (f32 compute)
    # would further halve HBM traffic on v5e/v6e.
    out = pl.pallas_call(
        kern,
        out_shape=jax.ShapeDtypeStruct((B, Cs, HW), f32),
        grid=(B,),
        in_specs=[
            pl.BlockSpec((1, Cs, HW), lambda b: (b, 0, 0)),   # s_flat
            pl.BlockSpec((1, Cc, HW), lambda b: (b, 0, 0)),   # c_flat
            pl.BlockSpec((Cs, Cs), lambda b: (0, 0)),         # folded s conv
            pl.BlockSpec((1, Cs), lambda b: (0, 0)),          # s BN shift
            pl.BlockSpec((Cc, Cc), lambda b: (0, 0)),         # folded c conv
            pl.BlockSpec((1, Cc), lambda b: (0, 0)),          # c BN shift
            pl.BlockSpec((D, 3 * D), lambda b: (0, 0)),       # w_qkv
            pl.BlockSpec((D, D), lambda b: (0, 0)),           # w_proj
            pl.BlockSpec((1, D), lambda b: (0, 0)),           # b_proj
            pl.BlockSpec((D, D), lambda b: (0, 0)),           # head indicator
        ],
        out_specs=pl.BlockSpec((1, Cs, HW), lambda b: (b, 0, 0)),
        compiler_params=pltpu.CompilerParams(
            dimension_semantics=("parallel",)),   # B shards across v7x's 2 TCs
    )(s_flat, c_flat, ws, params["s_bn_shift"], wc, params["c_bn_shift"],
      params["w_qkv"], params["w_proj"], params["b_proj"], hmat)

    # ChannelAtt returns its input unchanged -> s_feat / c_feat are passthrough.
    return sp_feat, co_feat, out.reshape(B, Cs, H, W)


# ---------------------------------------------------------------------------
# Pure-JAX reference (follows the PyTorch graph literally, incl. both einsums)
# ---------------------------------------------------------------------------
def afd_reference(sp_feat, co_feat, params, h=8):
    B, Cs, H, W = sp_feat.shape
    Cc = co_feat.shape[1]
    D = Cs + Cc
    scale = float(h) ** (-0.5)
    s_mean = jnp.mean(sp_feat, axis=(2, 3))
    c_mean = jnp.mean(co_feat, axis=(2, 3))
    s_att = s_mean @ params["s_conv_w"] * params["s_bn_scale"] + params["s_bn_shift"]
    c_att = c_mean @ params["c_conv_w"] * params["c_bn_scale"] + params["c_bn_shift"]
    sc = jnp.concatenate([s_att, c_att], axis=1)
    qkv = (sc @ params["w_qkv"]).reshape(B, 1, 3, h, D // h).transpose(2, 0, 3, 1, 4)
    q, k, v = qkv[0], qkv[1], qkv[2]
    ks = jax.nn.softmax(k, axis=1)
    ktv = jnp.einsum('bhnk,bhnv->bhkv', ks, v)
    fw = scale * jnp.einsum('bhnk,bhkv->bhnv', q, ktv)
    fw = fw.transpose(0, 2, 1, 3).reshape(B, -1)
    fw = fw @ params["w_proj"] + params["b_proj"]
    fw = fw.reshape(B, D, 1, 1)
    fs, fc = fw[:, :Cs], fw[:, D - Cc:]
    out = (1.0 + fs) * sp_feat + (1.0 + fc) * co_feat
    return out


# ---------------------------------------------------------------------------
def make_params(key, s_channels, c_channels):
    D = s_channels + c_channels
    ks = jax.random.split(key, 10)
    f32 = jnp.float32
    return {
        # 1x1 conv weights stored as (C_in, C_out); folded BN as scale/shift
        "s_conv_w": 0.1 * jax.random.normal(ks[0], (s_channels, s_channels), f32),
        "s_bn_scale": (1.0 + 0.1 * jax.random.normal(ks[1], (1, s_channels), f32)),
        "s_bn_shift": 0.1 * jax.random.normal(ks[2], (1, s_channels), f32),
        "c_conv_w": 0.1 * jax.random.normal(ks[3], (c_channels, c_channels), f32),
        "c_bn_scale": (1.0 + 0.1 * jax.random.normal(ks[4], (1, c_channels), f32)),
        "c_bn_shift": 0.1 * jax.random.normal(ks[5], (1, c_channels), f32),
        # Linear weights stored pre-transposed: y = x @ W
        "w_qkv": 0.1 * jax.random.normal(ks[6], (D, 3 * D), f32),
        "w_proj": 0.1 * jax.random.normal(ks[7], (D, D), f32),
        "b_proj": 0.1 * jax.random.normal(ks[8], (1, D), f32),
    }


if __name__ == "__main__":
    B, Cs, Cc, H, W, heads = 2, 16, 16, 16, 16, 8
    key = jax.random.PRNGKey(0)
    k_sp, k_co, k_par = jax.random.split(key, 3)
    sp_feat = jax.random.normal(k_sp, (B, Cs, H, W), jnp.float32)
    co_feat = jax.random.normal(k_co, (B, Cc, H, W), jnp.float32)
    params = make_params(k_par, Cs, Cc)

    s_out, c_out, out = afd_forward(sp_feat, co_feat, params, h=heads)
    out = jax.block_until_ready(out)

    ref = afd_reference(sp_feat, co_feat, params, h=heads)
    assert jnp.allclose(s_out, sp_feat) and jnp.allclose(c_out, co_feat)
    assert jnp.allclose(out, ref, atol=1e-4, rtol=1e-4), (
        float(jnp.max(jnp.abs(out - ref))))
    print("KERNEL_OK")
</pallas_src>

<mosaic_0001>
module attributes {stable_mosaic.version = 11 : i64} {
  func.func @_afd_fused_kernel(%arg0: i32, %arg1: memref<1x16x256xf32, #tpu.memory_space<vmem>>, %arg2: memref<1x16x256xf32, #tpu.memory_space<vmem>>, %arg3: memref<16x16xf32, #tpu.memory_space<vmem>>, %arg4: memref<1x16xf32, #tpu.memory_space<vmem>>, %arg5: memref<16x16xf32, #tpu.memory_space<vmem>>, %arg6: memref<1x16xf32, #tpu.memory_space<vmem>>, %arg7: memref<32x96xf32, #tpu.memory_space<vmem>>, %arg8: memref<32x32xf32, #tpu.memory_space<vmem>>, %arg9: memref<1x32xf32, #tpu.memory_space<vmem>>, %arg10: memref<32x32xf32, #tpu.memory_space<vmem>>, %arg11: memref<1x16x256xf32, #tpu.memory_space<vmem>>) attributes {dimension_semantics = [#tpu.dimension_semantics<parallel>], iteration_bounds = array<i64: 2>, scalar_prefetch = 0 : i64, scratch_operands = 0 : i64, tpu.core_type = #tpu.core_type<tc>, window_params = [{transform_indices = @transform_0, window_bounds = array<i64: 1, 16, 256>}, {transform_indices = @transform_1, window_bounds = array<i64: 1, 16, 256>}, {pipeline_mode = #tpu.pipeline_mode<synchronous>, transform_indices = @transform_2, window_bounds = array<i64: 16, 16>}, {pipeline_mode = #tpu.pipeline_mode<synchronous>, transform_indices = @transform_3, window_bounds = array<i64: 1, 16>}, {pipeline_mode = #tpu.pipeline_mode<synchronous>, transform_indices = @transform_4, window_bounds = array<i64: 16, 16>}, {pipeline_mode = #tpu.pipeline_mode<synchronous>, transform_indices = @transform_5, window_bounds = array<i64: 1, 16>}, {pipeline_mode = #tpu.pipeline_mode<synchronous>, transform_indices = @transform_6, window_bounds = array<i64: 32, 96>}, {pipeline_mode = #tpu.pipeline_mode<synchronous>, transform_indices = @transform_7, window_bounds = array<i64: 32, 32>}, {pipeline_mode = #tpu.pipeline_mode<synchronous>, transform_indices = @transform_8, window_bounds = array<i64: 1, 32>}, {pipeline_mode = #tpu.pipeline_mode<synchronous>, transform_indices = @transform_9, window_bounds = array<i64: 32, 32>}, {transform_indices = @transform_10, window_bounds = array<i64: 1, 16, 256>}]} {
    %c0 = arith.constant 0 : index
    %c0_0 = arith.constant 0 : index
    %c0_1 = arith.constant 0 : index
    %0 = vector.load %arg1[%c0, %c0_0, %c0_1] : memref<1x16x256xf32, #tpu.memory_space<vmem>>, vector<1x16x256xf32>
    %1 = vector.shape_cast %0 : vector<1x16x256xf32> to vector<16x256xf32>
    %c0_2 = arith.constant 0 : index
    %c0_3 = arith.constant 0 : index
    %c0_4 = arith.constant 0 : index
    %2 = vector.load %arg2[%c0_2, %c0_3, %c0_4] : memref<1x16x256xf32, #tpu.memory_space<vmem>>, vector<1x16x256xf32>
    %3 = vector.shape_cast %2 : vector<1x16x256xf32> to vector<16x256xf32>
    %cst = arith.constant dense<0.000000e+00> : vector<16xf32>
    %4 = vector.multi_reduction <add>, %1, %cst [1] : vector<16x256xf32> to vector<16xf32>
    %5 = vector.shape_cast %4 : vector<16xf32> to vector<16x1xf32>
    %cst_5 = arith.constant dense<0.000000e+00> : vector<16xf32>
    %6 = vector.multi_reduction <add>, %3, %cst_5 [1] : vector<16x256xf32> to vector<16xf32>
    %7 = vector.shape_cast %6 : vector<16xf32> to vector<16x1xf32>
    %8 = tpu.transpose %5, [1, 0] : vector<16x1xf32> -> vector<1x16xf32>
    %c0_6 = arith.constant 0 : index
    %c0_7 = arith.constant 0 : index
    %9 = vector.load %arg3[%c0_6, %c0_7] : memref<16x16xf32, #tpu.memory_space<vmem>>, vector<16x16xf32>
    %cst_8 = arith.constant dense<0.000000e+00> : vector<1x16xf32>
    %10 = tpu.matmul %8, %9, %cst_8 {dimension_numbers = #tpu.dot_dimension_numbers<[1], [0], [0], [1], [0, 0, 1, 1], [], []>} : vector<1x16xf32>, vector<16x16xf32>, vector<1x16xf32> -> vector<1x16xf32>
    %c0_9 = arith.constant 0 : index
    %c0_10 = arith.constant 0 : index
    %11 = vector.load %arg4[%c0_9, %c0_10] : memref<1x16xf32, #tpu.memory_space<vmem>>, vector<1x16xf32>
    %12 = arith.addf %10, %11 : vector<1x16xf32>
    %13 = tpu.transpose %7, [1, 0] : vector<16x1xf32> -> vector<1x16xf32>
    %c0_11 = arith.constant 0 : index
    %c0_12 = arith.constant 0 : index
    %14 = vector.load %arg5[%c0_11, %c0_12] : memref<16x16xf32, #tpu.memory_space<vmem>>, vector<16x16xf32>
    %cst_13 = arith.constant dense<0.000000e+00> : vector<1x16xf32>
    %15 = tpu.matmul %13, %14, %cst_13 {dimension_numbers = #tpu.dot_dimension_numbers<[1], [0], [0], [1], [0, 0, 1, 1], [], []>} : vector<1x16xf32>, vector<16x16xf32>, vector<1x16xf32> -> vector<1x16xf32>
    %c0_14 = arith.constant 0 : index
    %c0_15 = arith.constant 0 : index
    %16 = vector.load %arg6[%c0_14, %c0_15] : memref<1x16xf32, #tpu.memory_space<vmem>>, vector<1x16xf32>
    %17 = arith.addf %15, %16 : vector<1x16xf32>
    %18 = tpu.concatenate %12, %17 in 1 : vector<1x16xf32>, vector<1x16xf32> -> vector<1x32xf32>
    %c0_16 = arith.constant 0 : index
    %c0_17 = arith.constant 0 : index
    %19 = vector.load %arg7[%c0_16, %c0_17] : memref<32x96xf32, #tpu.memory_space<vmem>>, vector<32x96xf32>
    %cst_18 = arith.constant dense<0.000000e+00> : vector<1x96xf32>
    %20 = tpu.matmul %18, %19, %cst_18 {dimension_numbers = #tpu.dot_dimension_numbers<[1], [0], [0], [1], [0, 0, 1, 1], [], []>} : vector<1x32xf32>, vector<32x96xf32>, vector<1x96xf32> -> vector<1x96xf32>
    %21 = vector.extract_strided_slice %20 {offsets = [0, 0], sizes = [1, 32], strides = [1, 1]} : vector<1x96xf32> to vector<1x32xf32>
    %22 = vector.extract_strided_slice %20 {offsets = [0, 32], sizes = [1, 32], strides = [1, 1]} : vector<1x96xf32> to vector<1x32xf32>
    %23 = vector.extract_strided_slice %20 {offsets = [0, 64], sizes = [1, 32], strides = [1, 1]} : vector<1x96xf32> to vector<1x32xf32>
    %24 = vector.extract_strided_slice %22 {offsets = [0, 0], sizes = [1, 4], strides = [1, 1]} : vector<1x32xf32> to vector<1x4xf32>
    %25 = vector.extract_strided_slice %22 {offsets = [0, 4], sizes = [1, 4], strides = [1, 1]} : vector<1x32xf32> to vector<1x4xf32>
    %26 = vector.extract_strided_slice %22 {offsets = [0, 8], sizes = [1, 4], strides = [1, 1]} : vector<1x32xf32> to vector<1x4xf32>
    %27 = vector.extract_strided_slice %22 {offsets = [0, 12], sizes = [1, 4], strides = [1, 1]} : vector<1x32xf32> to vector<1x4xf32>
    %28 = vector.extract_strided_slice %22 {offsets = [0, 16], sizes = [1, 4], strides = [1, 1]} : vector<1x32xf32> to vector<1x4xf32>
    %29 = vector.extract_strided_slice %22 {offsets = [0, 20], sizes = [1, 4], strides = [1, 1]} : vector<1x32xf32> to vector<1x4xf32>
    %30 = vector.extract_strided_slice %22 {offsets = [0, 24], sizes = [1, 4], strides = [1, 1]} : vector<1x32xf32> to vector<1x4xf32>
    %31 = vector.extract_strided_slice %22 {offsets = [0, 28], sizes = [1, 4], strides = [1, 1]} : vector<1x32xf32> to vector<1x4xf32>
    %32 = arith.maximumf %24, %25 : vector<1x4xf32>
    %33 = arith.maximumf %32, %26 : vector<1x4xf32>
    %34 = arith.maximumf %33, %27 : vector<1x4xf32>
    %35 = arith.maximumf %34, %28 : vector<1x4xf32>
    %36 = arith.maximumf %35, %29 : vector<1x4xf32>
    %37 = arith.maximumf %36, %30 : vector<1x4xf32>
    %38 = arith.maximumf %37, %31 : vector<1x4xf32>
    %39 = tpu.concatenate %38, %38, %38, %38, %38, %38, %38, %38 in 1 : vector<1x4xf32>, vector<1x4xf32>, vector<1x4xf32>, vector<1x4xf32>, vector<1x4xf32>, vector<1x4xf32>, vector<1x4xf32>, vector<1x4xf32> -> vector<1x32xf32>
    %40 = arith.subf %22, %39 : vector<1x32xf32>
    %41 = math.exp %40 : vector<1x32xf32>
    %42 = vector.extract_strided_slice %41 {offsets = [0, 0], sizes = [1, 4], strides = [1, 1]} : vector<1x32xf32> to vector<1x4xf32>
    %43 = vector.extract_strided_slice %41 {offsets = [0, 4], sizes = [1, 4], strides = [1, 1]} : vector<1x32xf32> to vector<1x4xf32>
    %44 = vector.extract_strided_slice %41 {offsets = [0, 8], sizes = [1, 4], strides = [1, 1]} : vector<1x32xf32> to vector<1x4xf32>
    %45 = vector.extract_strided_slice %41 {offsets = [0, 12], sizes = [1, 4], strides = [1, 1]} : vector<1x32xf32> to vector<1x4xf32>
    %46 = vector.extract_strided_slice %41 {offsets = [0, 16], sizes = [1, 4], strides = [1, 1]} : vector<1x32xf32> to vector<1x4xf32>
    %47 = vector.extract_strided_slice %41 {offsets = [0, 20], sizes = [1, 4], strides = [1, 1]} : vector<1x32xf32> to vector<1x4xf32>
    %48 = vector.extract_strided_slice %41 {offsets = [0, 24], sizes = [1, 4], strides = [1, 1]} : vector<1x32xf32> to vector<1x4xf32>
    %49 = vector.extract_strided_slice %41 {offsets = [0, 28], sizes = [1, 4], strides = [1, 1]} : vector<1x32xf32> to vector<1x4xf32>
    %50 = arith.addf %42, %43 : vector<1x4xf32>
    %51 = arith.addf %50, %44 : vector<1x4xf32>
    %52 = arith.addf %51, %45 : vector<1x4xf32>
    %53 = arith.addf %52, %46 : vector<1x4xf32>
    %54 = arith.addf %53, %47 : vector<1x4xf32>
    %55 = arith.addf %54, %48 : vector<1x4xf32>
    %56 = arith.addf %55, %49 : vector<1x4xf32>
    %57 = tpu.concatenate %56, %56, %56, %56, %56, %56, %56, %56 in 1 : vector<1x4xf32>, vector<1x4xf32>, vector<1x4xf32>, vector<1x4xf32>, vector<1x4xf32>, vector<1x4xf32>, vector<1x4xf32>, vector<1x4xf32> -> vector<1x32xf32>
    %58 = arith.divf %41, %57 : vector<1x32xf32>
    %59 = arith.mulf %21, %58 : vector<1x32xf32>
    %c0_19 = arith.constant 0 : index
    %c0_20 = arith.constant 0 : index
    %60 = vector.load %arg10[%c0_19, %c0_20] : memref<32x32xf32, #tpu.memory_space<vmem>>, vector<32x32xf32>
    %cst_21 = arith.constant dense<0.000000e+00> : vector<1x32xf32>
    %61 = tpu.matmul %59, %60, %cst_21 {dimension_numbers = #tpu.dot_dimension_numbers<[1], [0], [0], [1], [0, 0, 1, 1], [], []>} : vector<1x32xf32>, vector<32x32xf32>, vector<1x32xf32> -> vector<1x32xf32>
    %cst_22 = arith.constant 0.353553385 : f32
    %62 = vector.broadcast %cst_22 : f32 to vector<1x32xf32>
    %63 = arith.mulf %62, %61 : vector<1x32xf32>
    %64 = arith.mulf %63, %23 : vector<1x32xf32>
    %c0_23 = arith.constant 0 : index
    %c0_24 = arith.constant 0 : index
    %65 = vector.load %arg8[%c0_23, %c0_24] : memref<32x32xf32, #tpu.memory_space<vmem>>, vector<32x32xf32>
    %cst_25 = arith.constant dense<0.000000e+00> : vector<1x32xf32>
    %66 = tpu.matmul %64, %65, %cst_25 {dimension_numbers = #tpu.dot_dimension_numbers<[1], [0], [0], [1], [0, 0, 1, 1], [], []>} : vector<1x32xf32>, vector<32x32xf32>, vector<1x32xf32> -> vector<1x32xf32>
    %c0_26 = arith.constant 0 : index
    %c0_27 = arith.constant 0 : index
    %67 = vector.load %arg9[%c0_26, %c0_27] : memref<1x32xf32, #tpu.memory_space<vmem>>, vector<1x32xf32>
    %68 = arith.addf %66, %67 : vector<1x32xf32>
    %69 = vector.extract_strided_slice %68 {offsets = [0, 0], sizes = [1, 16], strides = [1, 1]} : vector<1x32xf32> to vector<1x16xf32>
    %70 = tpu.transpose %69, [1, 0] : vector<1x16xf32> -> vector<16x1xf32>
    %71 = vector.extract_strided_slice %68 {offsets = [0, 16], sizes = [1, 16], strides = [1, 1]} : vector<1x32xf32> to vector<1x16xf32>
    %72 = tpu.transpose %71, [1, 0] : vector<1x16xf32> -> vector<16x1xf32>
    %cst_28 = arith.constant 1.000000e+00 : f32
    %73 = vector.broadcast %cst_28 : f32 to vector<16x1xf32>
    %74 = arith.addf %73, %70 : vector<16x1xf32>
    %75 = vector.broadcast %74 : vector<16x1xf32> to vector<16x256xf32>
    %76 = arith.mulf %75, %1 : vector<16x256xf32>
    %cst_29 = arith.constant 1.000000e+00 : f32
    %77 = vector.broadcast %cst_29 : f32 to vector<16x1xf32>
    %78 = arith.addf %77, %72 : vector<16x1xf32>
    %79 = vector.broadcast %78 : vector<16x1xf32> to vector<16x256xf32>
    %80 = arith.mulf %79, %3 : vector<16x256xf32>
    %81 = arith.addf %76, %80 : vector<16x256xf32>
    %c0_30 = arith.constant 0 : index
    %c0_31 = arith.constant 0 : index
    %c0_32 = arith.constant 0 : index
    %82 = vector.load %arg11[%c0_30, %c0_31, %c0_32] : memref<1x16x256xf32, #tpu.memory_space<vmem>>, vector<1x16x256xf32>
    %83 = vector.shape_cast %82 : vector<1x16x256xf32> to vector<16x256xf32>
    %84 = vector.shape_cast %81 : vector<16x256xf32> to vector<1x16x256xf32>
    tpu.vector_store %arg11[%c0_30, %c0_31, %c0_32], %84 {strides = array<i32>} : memref<1x16x256xf32, #tpu.memory_space<vmem>>, vector<1x16x256xf32>,
    return
  }
  func.func @transform_0(%arg0: i32) -> (i32, i32, i32) {
    %c0_i32 = arith.constant 0 : i32
    %c0_i32_0 = arith.constant 0 : i32
    %c0_i32_1 = arith.constant 0 : i32
    return %arg0, %c0_i32, %c0_i32_0 : i32, i32, i32
  }
  func.func @transform_1(%arg0: i32) -> (i32, i32, i32) {
    %c0_i32 = arith.constant 0 : i32
    %c0_i32_0 = arith.constant 0 : i32
    %c0_i32_1 = arith.constant 0 : i32
    return %arg0, %c0_i32, %c0_i32_0 : i32, i32, i32
  }
  func.func @transform_2(%arg0: i32) -> (i32, i32) {
    %c0_i32 = arith.constant 0 : i32
    %c0_i32_0 = arith.constant 0 : i32
    %c0_i32_1 = arith.constant 0 : i32
    return %c0_i32, %c0_i32_0 : i32, i32
  }
  func.func @transform_3(%arg0: i32) -> (i32, i32) {
    %c0_i32 = arith.constant 0 : i32
    %c0_i32_0 = arith.constant 0 : i32
    %c0_i32_1 = arith.constant 0 : i32
    return %c0_i32, %c0_i32_0 : i32, i32
  }
  func.func @transform_4(%arg0: i32) -> (i32, i32) {
    %c0_i32 = arith.constant 0 : i32
    %c0_i32_0 = arith.constant 0 : i32
    %c0_i32_1 = arith.constant 0 : i32
    return %c0_i32, %c0_i32_0 : i32, i32
  }
  func.func @transform_5(%arg0: i32) -> (i32, i32) {
    %c0_i32 = arith.constant 0 : i32
    %c0_i32_0 = arith.constant 0 : i32
    %c0_i32_1 = arith.constant 0 : i32
    return %c0_i32, %c0_i32_0 : i32, i32
  }
  func.func @transform_6(%arg0: i32) -> (i32, i32) {
    %c0_i32 = arith.constant 0 : i32
    %c0_i32_0 = arith.constant 0 : i32
    %c0_i32_1 = arith.constant 0 : i32
    return %c0_i32, %c0_i32_0 : i32, i32
  }
  func.func @transform_7(%arg0: i32) -> (i32, i32) {
    %c0_i32 = arith.constant 0 : i32
    %c0_i32_0 = arith.constant 0 : i32
    %c0_i32_1 = arith.constant 0 : i32
    return %c0_i32, %c0_i32_0 : i32, i32
  }
  func.func @transform_8(%arg0: i32) -> (i32, i32) {
    %c0_i32 = arith.constant 0 : i32
    %c0_i32_0 = arith.constant 0 : i32
    %c0_i32_1 = arith.constant 0 : i32
    return %c0_i32, %c0_i32_0 : i32, i32
  }
  func.func @transform_9(%arg0: i32) -> (i32, i32) {
    %c0_i32 = arith.constant 0 : i32
    %c0_i32_0 = arith.constant 0 : i32
    %c0_i32_1 = arith.constant 0 : i32
    return %c0_i32, %c0_i32_0 : i32, i32
  }
  func.func @transform_10(%arg0: i32) -> (i32, i32, i32) {
    %c0_i32 = arith.constant 0 : i32
    %c0_i32_0 = arith.constant 0 : i32
    %c0_i32_1 = arith.constant 0 : i32
    return %arg0, %c0_i32, %c0_i32_0 : i32, i32, i32
  }
}

</mosaic_0001>

<llo_original>
// kernel: tpu_custom_call.1
$region0: #{tpu_custom_call.1}
  #allocation0 [shape = 'u32[]', space=smem, size = 0x4, offset = 0x4, fixed_abs, tag = 'smem constant byte address 0x4 - core index']
  #allocation1 [shape = 'u32[72,128]{1,0:T(1,128)}', space=vmem, size = 0x9000, scoped, tag = 'internal scratch']
  %s0 = inlined_call_operand.hbm [shape: f32[2,16,256], index: 0, kind: input, shape index: {}]
  %s1 = inlined_call_operand.hbm [shape: f32[2,16,256], index: 1, kind: input, shape index: {}]
  %s2 = inlined_call_operand.hbm [shape: f32[16,16], index: 2, kind: input, shape index: {}]
  %s3 = inlined_call_operand.vmem [shape: f32[1,16], index: 3, kind: input, shape index: {}]
  %s4 = inlined_call_operand.hbm [shape: f32[16,16], index: 4, kind: input, shape index: {}]
  %s5 = inlined_call_operand.vmem [shape: f32[1,16], index: 5, kind: input, shape index: {}]
  %s6 = inlined_call_operand.hbm [shape: f32[32,96], index: 6, kind: input, shape index: {}]
  %s7 = inlined_call_operand.hbm [shape: f32[32,32], index: 7, kind: input, shape index: {}]
  %s8 = inlined_call_operand.vmem [shape: f32[1,32], index: 8, kind: input, shape index: {}]
  %s9 = inlined_call_operand.hbm [shape: f32[32,32], index: 9, kind: input, shape index: {}]
  %s10 = inlined_call_operand.hbm [shape: f32[2,16,256], index: 10, kind: output, shape index: {}]
  %s11 = sld [smem:[#allocation0]]
  $region101: #{tpu_custom_call.1} parent=0
    _
  %s13 = ssub.s32 1, %s11
  %s14 = scalar_select 0, %s13, %s11
  $region1: #{tpu_custom_call.1} parent=0
    #allocation2 [shape = 'u8[32768]{0}', space=vmem, size = 0x8000, scoped, tag = 'input window, operand 0']
    #allocation3 [shape = 's32[2]{0}', space=sflag, size = 0x8, scoped, tag = 'scoped memory for tpu_custom_call.1']
    #allocation4 [shape = 's32[2]{0}', space=sflag, size = 0x8, scoped, tag = 'scoped memory for tpu_custom_call.1']
    #allocation5 [shape = 'u8[32768]{0}', space=vmem, size = 0x8000, scoped, tag = 'input window, operand 1']
    #allocation6 [shape = 's32[2]{0}', space=sflag, size = 0x8, scoped, tag = 'scoped memory for tpu_custom_call.1']
    #allocation7 [shape = 'u8[8192]{0}', space=vmem, size = 0x2000, scoped, tag = 'input window, operand 2, single buffered']
    #allocation8 [shape = 'u8[8192]{0}', space=vmem, size = 0x2000, scoped, tag = 'input window, operand 4, single buffered']
    #allocation9 [shape = 's32[1]{0}', space=sflag, size = 0x4, scoped, tag = 'scoped memory for tpu_custom_call.1']
    #allocation10 [shape = 'u8[16384]{0}', space=vmem, size = 0x4000, scoped, tag = 'input window, operand 6, single buffered']
    #allocation11 [shape = 'u8[16384]{0}', space=vmem, size = 0x4000, scoped, tag = 'input window, operand 7, single buffered']
    #allocation12 [shape = 's32[1]{0}', space=sflag, size = 0x4, scoped, tag = 'scoped memory for tpu_custom_call.1']
    #allocation13 [shape = 'u8[16384]{0}', space=vmem, size = 0x4000, scoped, tag = 'input window, operand 9, single buffered']
    #allocation14 [shape = 'u8[32768]{0}', space=vmem, size = 0x8000, scoped, tag = 'output window, operand 0']
    %15 = vsyncpa [#allocation3], 0
    %s16 = scalar_lea.sflag [#allocation3], 1
    %17 = vsyncpa %s16, 0
    %18 = vsyncpa [#allocation6], 0
    %s19 = scalar_lea.sflag [#allocation6], 1
    %20 = vsyncpa %s19, 0
    %21 = vsyncpa [#allocation9], 0
    %22 = vsyncpa [#allocation12], 0
    %23 = vsyncpa [#allocation4], 0
    %s24 = scalar_lea.sflag [#allocation4], 1
    %25 = vsyncpa %s24, 0
    loop: start=0, step=1, limit=4
    $region2: #{tpu_custom_call.1} parent=1 // loop_pre_header
      _
    $region3: #{tpu_custom_call.1} parent=1 // loop_header
      %s27 = sphi 0, %s31
      %p28 = scmp.ge.s32.totalorder %s27, 4
      %s37 = sphi 0, %s39
      %s40 = sphi 0, %s37
      %s41 = sphi 0, %s40
      %s57 = sphi 0, %s41
      %s63 = sphi 0, %s65
      %s66 = sphi 0, %s63
      %s67 = sphi 0, %s66
      %s83 = sphi 0, %s67
      %s87 = sphi 0, %s87
      %s89 = sphi 0, %s87
      %s90 = sphi 0, %s89
      %s104 = sphi 0, %s90
      %s108 = sphi 0, %s108
      %s110 = sphi 0, %s108
      %s111 = sphi 0, %s110
      %s125 = sphi 0, %s111
      %s129 = sphi 0, %s129
      %s131 = sphi 0, %s129
      %s132 = sphi 0, %s131
      %s146 = sphi 0, %s132
      %s150 = sphi 0, %s150
      %s152 = sphi 0, %s150
      %s153 = sphi 0, %s152
      %s167 = sphi 0, %s153
      %s171 = sphi 0, %s171
      %s173 = sphi 0, %s171
      %s174 = sphi 0, %s173
      %s188 = sphi 0, %s174
      %s192 = sphi 0, %s192
      %s194 = sphi 0, %s192
      %s195 = sphi 0, %s194
      %s209 = sphi 0, %s195
      %s213 = sphi 0, %s213
      %s215 = sphi 0, %s213
      %s216 = sphi 0, %s215
      %s230 = sphi 0, %s216
      %s234 = sphi 0, %s234
      %s236 = sphi 0, %s234
      %s237 = sphi 0, %s236
      %s251 = sphi 0, %s237
      %s257 = sphi 0, %s259
      %s260 = sphi 0, %s257
      %s261 = sphi 0, %s260
      %s277 = sphi 0, %s261
    $region4: #{tpu_custom_call.1} parent=1 // loop_header_branch
      %30 = sbr.rel (%p28) target = $region8
    $region5: #{tpu_custom_call.1} parent=1 // loop_body
      %s32 = ssub.s32 %s27, 1
      %s33 = ssub.s32 %s27, 2
      %s34 = sadd.s32 %s27, 1
      %s35 = ssub.s32 %s27, %s34
      %p36 = scmp.eq.s32.totalorder %s35, 0
      %s38 = sadd.s32 %s37, 1
      %s39 = scalar_select %p36, %s37, %s38
      %p42 = pneg %p36
      %p43 = scmp.eq.s32.totalorder %s27, 1
      %p44 = por %p42, %p43
      %p45 = scmp.ne.s32.totalorder %s37, %s40
      %p46 = scmp.eq.s32.totalorder %s27, 0
      %p47 = por %p45, %p46
      %p48 = scmp.ne.s32.totalorder %s37, %s40
      %p49 = scmp.eq.s32.totalorder %s32, 1
      %p50 = por %p48, %p49
      %p51 = scmp.ne.s32.totalorder %s40, %s41
      %p52 = scmp.eq.s32.totalorder %s32, 0
      %p53 = por %p51, %p52
      %p54 = scmp.ne.s32.totalorder %s40, %s41
      %p55 = scmp.eq.s32.totalorder %s33, 1
      %p56 = por %p54, %p55
      %p58 = scmp.ne.s32.totalorder %s41, %s57
      %p59 = scmp.eq.s32.totalorder %s33, 0
      %p60 = por %p58, %p59
      %s61 = ssub.s32 %s27, %s34
      %p62 = scmp.eq.s32.totalorder %s61, 0
      %s64 = sadd.s32 %s63, 1
      %s65 = scalar_select %p62, %s63, %s64
      %p68 = pneg %p62
      %p69 = scmp.eq.s32.totalorder %s27, 1
      %p70 = por %p68, %p69
      %p71 = scmp.ne.s32.totalorder %s63, %s66
      %p72 = scmp.eq.s32.totalorder %s27, 0
      %p73 = por %p71, %p72
      %p74 = scmp.ne.s32.totalorder %s63, %s66
      %p75 = scmp.eq.s32.totalorder %s32, 1
      %p76 = por %p74, %p75
      %p77 = scmp.ne.s32.totalorder %s66, %s67
      %p78 = scmp.eq.s32.totalorder %s32, 0
      %p79 = por %p77, %p78
      %p80 = scmp.ne.s32.totalorder %s66, %s67
      %p81 = scmp.eq.s32.totalorder %s33, 1
      %p82 = por %p80, %p81
      %p84 = scmp.ne.s32.totalorder %s67, %s83
      %p85 = scmp.eq.s32.totalorder %s33, 0
      %p86 = por %p84, %p85
      %s88 = sadd.s32 %s87, 1
      %p91 = scmp.eq.s32.totalorder %s27, 1
      %p92 = scmp.ne.s32.totalorder %s87, %s89
      %p93 = scmp.eq.s32.totalorder %s27, 0
      %p94 = por %p92, %p93
      %p95 = scmp.ne.s32.totalorder %s87, %s89
      %p96 = scmp.eq.s32.totalorder %s32, 1
      %p97 = por %p95, %p96
      %p98 = scmp.ne.s32.totalorder %s89, %s90
      %p99 = scmp.eq.s32.totalorder %s32, 0
      %p100 = por %p98, %p99
      %p101 = scmp.ne.s32.totalorder %s89, %s90
      %p102 = scmp.eq.s32.totalorder %s33, 1
      %p103 = por %p101, %p102
      %p105 = scmp.ne.s32.totalorder %s90, %s104
      %p106 = scmp.eq.s32.totalorder %s33, 0
      %p107 = por %p105, %p106
      %s109 = sadd.s32 %s108, 1
      %p112 = scmp.eq.s32.totalorder %s27, 1
      %p113 = scmp.ne.s32.totalorder %s108, %s110
      %p114 = scmp.eq.s32.totalorder %s27, 0
      %p115 = por %p113, %p114
      %p116 = scmp.ne.s32.totalorder %s108, %s110
      %p117 = scmp.eq.s32.totalorder %s32, 1
      %p118 = por %p116, %p117
      %p119 = scmp.ne.s32.totalorder %s110, %s111
      %p120 = scmp.eq.s32.totalorder %s32, 0
      %p121 = por %p119, %p120
      %p122 = scmp.ne.s32.totalorder %s110, %s111
      %p123 = scmp.eq.s32.totalorder %s33, 1
      %p124 = por %p122, %p123
      %p126 = scmp.ne.s32.totalorder %s111, %s125
      %p127 = scmp.eq.s32.totalorder %s33, 0
      %p128 = por %p126, %p127
      %s130 = sadd.s32 %s129, 1
      %p133 = scmp.eq.s32.totalorder %s27, 1
      %p134 = scmp.ne.s32.totalorder %s129, %s131
      %p135 = scmp.eq.s32.totalorder %s27, 0
      %p136 = por %p134, %p135
      %p137 = scmp.ne.s32.totalorder %s129, %s131
      %p138 = scmp.eq.s32.totalorder %s32, 1
      %p139 = por %p137, %p138
      %p140 = scmp.ne.s32.totalorder %s131, %s132
      %p141 = scmp.eq.s32.totalorder %s32, 0
      %p142 = por %p140, %p141
      %p143 = scmp.ne.s32.totalorder %s131, %s132
      %p144 = scmp.eq.s32.totalorder %s33, 1
      %p145 = por %p143, %p144
      %p147 = scmp.ne.s32.totalorder %s132, %s146
      %p148 = scmp.eq.s32.totalorder %s33, 0
      %p149 = por %p147, %p148
      %s151 = sadd.s32 %s150, 1
      %p154 = scmp.eq.s32.totalorder %s27, 1
      %p155 = scmp.ne.s32.totalorder %s150, %s152
      %p156 = scmp.eq.s32.totalorder %s27, 0
      %p157 = por %p155, %p156
      %p158 = scmp.ne.s32.totalorder %s150, %s152
      %p159 = scmp.eq.s32.totalorder %s32, 1
      %p160 = por %p158, %p159
      %p161 = scmp.ne.s32.totalorder %s152, %s153
      %p162 = scmp.eq.s32.totalorder %s32, 0
      %p163 = por %p161, %p162
      %p164 = scmp.ne.s32.totalorder %s152, %s153
      %p165 = scmp.eq.s32.totalorder %s33, 1
      %p166 = por %p164, %p165
      %p168 = scmp.ne.s32.totalorder %s153, %s167
      %p169 = scmp.eq.s32.totalorder %s33, 0
      %p170 = por %p168, %p169
      %s172 = sadd.s32 %s171, 1
      %p175 = scmp.eq.s32.totalorder %s27, 1
      %p176 = scmp.ne.s32.totalorder %s171, %s173
      %p177 = scmp.eq.s32.totalorder %s27, 0
      %p178 = por %p176, %p177
      %p179 = scmp.ne.s32.totalorder %s171, %s173
      %p180 = scmp.eq.s32.totalorder %s32, 1
      %p181 = por %p179, %p180
      %p182 = scmp.ne.s32.totalorder %s173, %s174
      %p183 = scmp.eq.s32.totalorder %s32, 0
      %p184 = por %p182, %p183
      %p185 = scmp.ne.s32.totalorder %s173, %s174
      %p186 = scmp.eq.s32.totalorder %s33, 1
      %p187 = por %p185, %p186
      %p189 = scmp.ne.s32.totalorder %s174, %s188
      %p190 = scmp.eq.s32.totalorder %s33, 0
      %p191 = por %p189, %p190
      %s193 = sadd.s32 %s192, 1
      %p196 = scmp.eq.s32.totalorder %s27, 1
      %p197 = scmp.ne.s32.totalorder %s192, %s194
      %p198 = scmp.eq.s32.totalorder %s27, 0
      %p199 = por %p197, %p198
      %p200 = scmp.ne.s32.totalorder %s192, %s194
      %p201 = scmp.eq.s32.totalorder %s32, 1
      %p202 = por %p200, %p201
      %p203 = scmp.ne.s32.totalorder %s194, %s195
      %p204 = scmp.eq.s32.totalorder %s32, 0
      %p205 = por %p203, %p204
      %p206 = scmp.ne.s32.totalorder %s194, %s195
      %p207 = scmp.eq.s32.totalorder %s33, 1
      %p208 = por %p206, %p207
      %p210 = scmp.ne.s32.totalorder %s195, %s209
      %p211 = scmp.eq.s32.totalorder %s33, 0
      %p212 = por %p210, %p211
      %s214 = sadd.s32 %s213, 1
      %p217 = scmp.eq.s32.totalorder %s27, 1
      %p218 = scmp.ne.s32.totalorder %s213, %s215
      %p219 = scmp.eq.s32.totalorder %s27, 0
      %p220 = por %p218, %p219
      %p221 = scmp.ne.s32.totalorder %s213, %s215
      %p222 = scmp.eq.s32.totalorder %s32, 1
      %p223 = por %p221, %p222
      %p224 = scmp.ne.s32.totalorder %s215, %s216
      %p225 = scmp.eq.s32.totalorder %s32, 0
      %p226 = por %p224, %p225
      %p227 = scmp.ne.s32.totalorder %s215, %s216
      %p228 = scmp.eq.s32.totalorder %s33, 1
      %p229 = por %p227, %p228
      %p231 = scmp.ne.s32.totalorder %s216, %s230
      %p232 = scmp.eq.s32.totalorder %s33, 0
      %p233 = por %p231, %p232
      %s235 = sadd.s32 %s234, 1
      %p238 = scmp.eq.s32.totalorder %s27, 1
      %p239 = scmp.ne.s32.totalorder %s234, %s236
      %p240 = scmp.eq.s32.totalorder %s27, 0
      %p241 = por %p239, %p240
      %p242 = scmp.ne.s32.totalorder %s234, %s236
      %p243 = scmp.eq.s32.totalorder %s32, 1
      %p244 = por %p242, %p243
      %p245 = scmp.ne.s32.totalorder %s236, %s237
      %p246 = scmp.eq.s32.totalorder %s32, 0
      %p247 = por %p245, %p246
      %p248 = scmp.ne.s32.totalorder %s236, %s237
      %p249 = scmp.eq.s32.totalorder %s33, 1
      %p250 = por %p248, %p249
      %p252 = scmp.ne.s32.totalorder %s237, %s251
      %p253 = scmp.eq.s32.totalorder %s33, 0
      %p254 = por %p252, %p253
      %s255 = ssub.s32 %s27, %s34
      %p256 = scmp.eq.s32.totalorder %s255, 0
      %s258 = sadd.s32 %s257, 1
      %s259 = scalar_select %p256, %s257, %s258
      %p262 = pneg %p256
      %p263 = scmp.eq.s32.totalorder %s27, 1
      %p264 = por %p262, %p263
      %p265 = scmp.ne.s32.totalorder %s257, %s260
      %p266 = scmp.eq.s32.totalorder %s27, 0
      %p267 = por %p265, %p266
      %p268 = scmp.ne.s32.totalorder %s257, %s260
      %p269 = scmp.eq.s32.totalorder %s32, 1
      %p270 = por %p268, %p269
      %p271 = scmp.ne.s32.totalorder %s260, %s261
      %p272 = scmp.eq.s32.totalorder %s32, 0
      %p273 = por %p271, %p272
      %p274 = scmp.ne.s32.totalorder %s260, %s261
      %p275 = scmp.eq.s32.totalorder %s33, 1
      %p276 = por %p274, %p275
      %p278 = scmp.ne.s32.totalorder %s261, %s277
      %p279 = scmp.eq.s32.totalorder %s33, 0
      %p280 = por %p278, %p279
      %p281 = scmp.le.s32.totalorder 1, %s27
      %p282 = scmp.lt.s32.totalorder %s27, 3
      %p283 = pnand %p281, %p282
      %p284 = pneg %p283
      // Predicated region
      $region9: #{tpu_custom_call.1} parent=5 // pred_check
        _
      $region10: #{tpu_custom_call.1} parent=5 // pred_check_branch
        %286 = sbr.rel (%p283) target = $region12
      $region11: #{tpu_custom_call.1} parent=5 // pred_region
        %s287 = ssub.s32 %s27, 1
        // Predicated region
        $region13: #{tpu_custom_call.1} parent=11 // pred_check
          %p288 = pneg %p100
        $region14: #{tpu_custom_call.1} parent=11 // pred_check_branch
          %290 = sbr.rel (%p288) target = $region16
        $region15: #{tpu_custom_call.1} parent=11 // pred_region
          %292 = vsyncadd [#allocation6], 0
          %s293 = sshll.u32 %s2, 4
          %s294 = int_to_ptr.hbm [resolvable:$true] %s293
          %s295 = sshll.u32 [#allocation7], 4
          %s296 = int_to_ptr.vmem [resolvable:$true] %s295
          %301 = dma.hbm_to_vmem [thread:$0]  %s294, 256, %s296, [#allocation6], 128, 128, 8
        $region16: #{tpu_custom_call.1} parent=11 // pred_fallthru
          _
        // Predicated region
        $region17: #{tpu_custom_call.1} parent=11 // pred_check
          %p302 = pneg %p121
        $region18: #{tpu_custom_call.1} parent=11 // pred_check_branch
          %304 = sbr.rel (%p302) target = $region20
        $region19: #{tpu_custom_call.1} parent=11 // pred_region
          _
        $region20: #{tpu_custom_call.1} parent=11 // pred_fallthru
          _
        // Predicated region
        $region21: #{tpu_custom_call.1} parent=11 // pred_check
          %p305 = pneg %p142
        $region22: #{tpu_custom_call.1} parent=11 // pred_check_branch
          %307 = sbr.rel (%p305) target = $region24
        $region23: #{tpu_custom_call.1} parent=11 // pred_region
          %309 = vsyncadd [#allocation9], 0
          %s310 = sshll.u32 %s4, 4
          %s311 = int_to_ptr.hbm [resolvable:$true] %s310
          %s312 = sshll.u32 [#allocation8], 4
          %s313 = int_to_ptr.vmem [resolvable:$true] %s312
          %318 = dma.hbm_to_vmem [thread:$0]  %s311, 256, %s313, [#allocation9], 128, 128, 8
        $region24: #{tpu_custom_call.1} parent=11 // pred_fallthru
          _
        // Predicated region
        $region25: #{tpu_custom_call.1} parent=11 // pred_check
          %p319 = pneg %p163
        $region26: #{tpu_custom_call.1} parent=11 // pred_check_branch
          %321 = sbr.rel (%p319) target = $region28
        $region27: #{tpu_custom_call.1} parent=11 // pred_region
          _
        $region28: #{tpu_custom_call.1} parent=11 // pred_fallthru
          _
        // Predicated region
        $region29: #{tpu_custom_call.1} parent=11 // pred_check
          %p322 = pneg %p184
        $region30: #{tpu_custom_call.1} parent=11 // pred_check_branch
          %324 = sbr.rel (%p322) target = $region32
        $region31: #{tpu_custom_call.1} parent=11 // pred_region
          %326 = vsyncadd [#allocation9], 0
          %s327 = sshll.u32 %s6, 4
          %s328 = int_to_ptr.hbm [resolvable:$true] %s327
          %s329 = sshll.u32 [#allocation10], 4
          %s330 = int_to_ptr.vmem [resolvable:$true] %s329
          %335 = dma.hbm_to_vmem [thread:$0]  %s328, 512, %s330, [#allocation9], 128, 128, 8
        $region32: #{tpu_custom_call.1} parent=11 // pred_fallthru
          _
        // Predicated region
        $region33: #{tpu_custom_call.1} parent=11 // pred_check
          %p336 = pneg %p205
        $region34: #{tpu_custom_call.1} parent=11 // pred_check_branch
          %338 = sbr.rel (%p336) target = $region36
        $region35: #{tpu_custom_call.1} parent=11 // pred_region
          %340 = vsyncadd [#allocation12], 0
          %s341 = sshll.u32 %s7, 4
          %s342 = int_to_ptr.hbm [resolvable:$true] %s341
          %s343 = sshll.u32 [#allocation11], 4
          %s344 = int_to_ptr.vmem [resolvable:$true] %s343
          %349 = dma.hbm_to_vmem [thread:$0]  %s342, 512, %s344, [#allocation12], 128, 128, 8
        $region36: #{tpu_custom_call.1} parent=11 // pred_fallthru
          _
        // Predicated region
        $region37: #{tpu_custom_call.1} parent=11 // pred_check
          %p350 = pneg %p226
        $region38: #{tpu_custom_call.1} parent=11 // pred_check_branch
          %352 = sbr.rel (%p350) target = $region40
        $region39: #{tpu_custom_call.1} parent=11 // pred_region
          _
        $region40: #{tpu_custom_call.1} parent=11 // pred_fallthru
          _
        // Predicated region
        $region41: #{tpu_custom_call.1} parent=11 // pred_check
          %p353 = pneg %p247
        $region42: #{tpu_custom_call.1} parent=11 // pred_check_branch
          %355 = sbr.rel (%p353) target = $region44
        $region43: #{tpu_custom_call.1} parent=11 // pred_region
          %357 = vsyncadd [#allocation12], 0
          %s358 = sshll.u32 %s9, 4
          %s359 = int_to_ptr.hbm [resolvable:$true] %s358
          %s360 = sshll.u32 [#allocation13], 4
          %s361 = int_to_ptr.vmem [resolvable:$true] %s360
          %366 = dma.hbm_to_vmem [thread:$0]  %s359, 512, %s361, [#allocation12], 128, 128, 8
        $region44: #{tpu_custom_call.1} parent=11 // pred_fallthru
          _
      $region12: #{tpu_custom_call.1} parent=5 // pred_fallthru
        _
      %p367 = scmp.lt.s32.totalorder %s27, 2
      // Predicated region
      $region45: #{tpu_custom_call.1} parent=5 // pred_check
        %p368 = pneg %p367
      $region46: #{tpu_custom_call.1} parent=5 // pred_check_branch
        %370 = sbr.rel (%p368) target = $region48
      $region47: #{tpu_custom_call.1} parent=5 // pred_region
        // Predicated region
        $region49: #{tpu_custom_call.1} parent=47 // pred_check
          %p371 = pneg %p47
        $region50: #{tpu_custom_call.1} parent=47 // pred_check_branch
          %373 = sbr.rel (%p371) target = $region52
        $region51: #{tpu_custom_call.1} parent=47 // pred_region
          %s374 = sand.u32 %s37, 1
          %s375 = scalar_lea.sflag [#allocation3], %s374
          %s376 = sand.u32 %s37, 1
          %s377 = smul.addr %s376, 32
          %s378 = scalar_lea.vmem [#allocation2], %s377
          %380 = vsyncadd %s375, 0
          %s381 = smul.addr %s27, 4
          %s382 = smul.addr %s381, 8
          %s383 = scalar_lea.hbm %s0, %s382
          %s384 = sshll.u32 %s383, 4
          %s385 = int_to_ptr.hbm [resolvable:$true] %s384
          %s386 = sshll.u32 %s378, 4
          %s387 = int_to_ptr.vmem [resolvable:$true] %s386
          %392 = dma.hbm_to_vmem [thread:$0]  %s385, 512, %s387, %s375, 256, 256, 16
        $region52: #{tpu_custom_call.1} parent=47 // pred_fallthru
          _
        // Predicated region
        $region53: #{tpu_custom_call.1} parent=47 // pred_check
          %p393 = pneg %p73
        $region54: #{tpu_custom_call.1} parent=47 // pred_check_branch
          %395 = sbr.rel (%p393) target = $region56
        $region55: #{tpu_custom_call.1} parent=47 // pred_region
          %s396 = sand.u32 %s27, 1
          %s397 = scalar_lea.sflag [#allocation6], %s396
          %s398 = sand.u32 %s63, 1
          %s399 = smul.addr %s398, 32
          %s400 = scalar_lea.vmem [#allocation5], %s399
          %402 = vsyncadd %s397, 0
          %s403 = smul.addr %s27, 4
          %s404 = smul.addr %s403, 8
          %s405 = scalar_lea.hbm %s1, %s404
          %s406 = sshll.u32 %s405, 4
          %s407 = int_to_ptr.hbm [resolvable:$true] %s406
          %s408 = sshll.u32 %s400, 4
          %s409 = int_to_ptr.vmem [resolvable:$true] %s408
          %414 = dma.hbm_to_vmem [thread:$0]  %s407, 512, %s409, %s397, 256, 256, 16
        $region56: #{tpu_custom_call.1} parent=47 // pred_fallthru
          _
      $region48: #{tpu_custom_call.1} parent=5 // pred_fallthru
        _
      %p415 = scmp.le.s32.totalorder 1, %s27
      %p416 = scmp.lt.s32.totalorder %s27, 3
      %p417 = pnand %p415, %p416
      %p418 = pneg %p417
      // Predicated region
      $region57: #{tpu_custom_call.1} parent=5 // pred_check
        _
      $region58: #{tpu_custom_call.1} parent=5 // pred_check_branch
        %420 = sbr.rel (%p417) target = $region60
      $region59: #{tpu_custom_call.1} parent=5 // pred_region
        %s421 = ssub.s32 %s27, 1
        %s422 = sand.u32 %s40, 1
        %s423 = scalar_lea.sflag [#allocation3], %s422
        %s424 = sand.u32 %s40, 1
        %s425 = smul.addr %s424, 32
        %s426 = scalar_lea.vmem [#allocation2], %s425
        // Predicated region
        $region61: #{tpu_custom_call.1} parent=59 // pred_check
          %p427 = pneg %p53
        $region62: #{tpu_custom_call.1} parent=59 // pred_check_branch
          %429 = sbr.rel (%p427) target = $region64
        $region63: #{tpu_custom_call.1} parent=59 // pred_region
          %431 = dma.done %s423, 512
        $region64: #{tpu_custom_call.1} parent=59 // pred_fallthru
          _
        %s432 = sand.u32 %s32, 1
        %s433 = scalar_lea.sflag [#allocation6], %s432
        %s434 = sand.u32 %s66, 1
        %s435 = smul.addr %s434, 32
        %s436 = scalar_lea.vmem [#allocation5], %s435
        // Predicated region
        $region65: #{tpu_custom_call.1} parent=59 // pred_check
          %p437 = pneg %p79
        $region66: #{tpu_custom_call.1} parent=59 // pred_check_branch
          %439 = sbr.rel (%p437) target = $region68
        $region67: #{tpu_custom_call.1} parent=59 // pred_region
          %441 = dma.done %s433, 512
        $region68: #{tpu_custom_call.1} parent=59 // pred_fallthru
          _
        // Predicated region
        $region69: #{tpu_custom_call.1} parent=59 // pred_check
          %p442 = pneg %p100
        $region70: #{tpu_custom_call.1} parent=59 // pred_check_branch
          %444 = sbr.rel (%p442) target = $region72
        $region71: #{tpu_custom_call.1} parent=59 // pred_region
          %446 = dma.done [#allocation6], 256
        $region72: #{tpu_custom_call.1} parent=59 // pred_fallthru
          _
        // Predicated region
        $region73: #{tpu_custom_call.1} parent=59 // pred_check
          %p447 = pneg %p142
        $region74: #{tpu_custom_call.1} parent=59 // pred_check_branch
          %449 = sbr.rel (%p447) target = $region76
        $region75: #{tpu_custom_call.1} parent=59 // pred_region
          %451 = dma.done [#allocation9], 256
        $region76: #{tpu_custom_call.1} parent=59 // pred_fallthru
          _
        // Predicated region
        $region77: #{tpu_custom_call.1} parent=59 // pred_check
          %p452 = pneg %p184
        $region78: #{tpu_custom_call.1} parent=59 // pred_check_branch
          %454 = sbr.rel (%p452) target = $region80
        $region79: #{tpu_custom_call.1} parent=59 // pred_region
          %456 = dma.done [#allocation9], 512
        $region80: #{tpu_custom_call.1} parent=59 // pred_fallthru
          _
        // Predicated region
        $region81: #{tpu_custom_call.1} parent=59 // pred_check
          %p457 = pneg %p205
        $region82: #{tpu_custom_call.1} parent=59 // pred_check_branch
          %459 = sbr.rel (%p457) target = $region84
        $region83: #{tpu_custom_call.1} parent=59 // pred_region
          %461 = dma.done [#allocation12], 512
        $region84: #{tpu_custom_call.1} parent=59 // pred_fallthru
          _
        // Predicated region
        $region85: #{tpu_custom_call.1} parent=59 // pred_check
          %p462 = pneg %p247
        $region86: #{tpu_custom_call.1} parent=59 // pred_check_branch
          %464 = sbr.rel (%p462) target = $region88
        $region87: #{tpu_custom_call.1} parent=59 // pred_region
          %466 = dma.done [#allocation12], 512
        $region88: #{tpu_custom_call.1} parent=59 // pred_fallthru
          _
        %s467 = sand.u32 %s40, 1
        %s468 = scalar_lea.sflag [#allocation3], %s467
        %s469 = sand.u32 %s40, 1
        %s470 = smul.addr %s469, 32
        %s471 = scalar_lea.vmem [#allocation2], %s470
        %p472 = pneg %p53
        %p473 = pneg %p50
        %s474 = sand.u32 %s32, 1
        %s475 = scalar_lea.sflag [#allocation6], %s474
        %s476 = sand.u32 %s66, 1
        %s477 = smul.addr %s476, 32
        %s478 = scalar_lea.vmem [#allocation5], %s477
        %p479 = pneg %p79
        %p480 = pneg %p76
        %p481 = pneg %p100
        %p482 = pneg %p97
        %p483 = pneg %p121
        %p484 = pneg %p118
        %p485 = pneg %p142
        %p486 = pneg %p139
        %p487 = pneg %p163
        %p488 = pneg %p160
        %p489 = pneg %p184
        %p490 = pneg %p181
        %p491 = pneg %p205
        %p492 = pneg %p202
        %p493 = pneg %p226
        %p494 = pneg %p223
        %p495 = pneg %p247
        %p496 = pneg %p244
        %p497 = pneg %p273
        %p498 = pneg %p270
        %s499 = sand.u32 %s260, 1
        %s500 = scalar_lea.sflag [#allocation4], %s499
        %s501 = sand.u32 %s260, 1
        %s502 = smul.addr %s501, 32
        %s503 = scalar_lea.vmem [#allocation14], %s502
        %v504 = vld [vmem:[%s426] sm:$0xff]
        %v505 = vld [vmem:[%s426 + $0x8] sm:$0xff]
        %v506 = vld [vmem:[%s426 + $0x10] sm:$0xff]
        %v507 = vld [vmem:[%s426 + $0x18] sm:$0xff]
        %v508 = vld [vmem:[%s436] sm:$0xff]
        %v509 = vld [vmem:[%s436 + $0x8] sm:$0xff]
        %v510 = vld [vmem:[%s436 + $0x10] sm:$0xff]
        %v511 = vld [vmem:[%s436 + $0x18] sm:$0xff]
        %v512 = vadd.f32 %v504, %v505
        %513 = vadd.xlane.f32.xlu0 %v512
        %v514 = vpop.xlane.xlu0 %513
        %v515 = vadd.f32 %v506, %v507
        %516 = vadd.xlane.f32.xlu0 %v515
        %v517 = vpop.xlane.xlu0 %516
        %v518 = vadd.f32 %v508, %v509
        %519 = vadd.xlane.f32.xlu0 %v518
        %v520 = vpop.xlane.xlu0 %519
        %v521 = vadd.f32 %v510, %v511
        %522 = vadd.xlane.f32.xlu0 %v521
        %v523 = vpop.xlane.xlu0 %522
        %524 = vxpose.xlu0.b32.start [1/16] %v514, 128
        %525 = vxpose.xlu0.b32.cont [2/16] %v517, 128
        %526 = vxpose.xlu0.b32.cont [3/16] 0.0, 128
        %527 = vxpose.xlu0.b32.cont [4/16] 0.0, 128
        %528 = vxpose.xlu0.b32.cont [5/16] 0.0, 128
        %529 = vxpose.xlu0.b32.cont [6/16] 0.0, 128
        %530 = vxpose.xlu0.b32.cont [7/16] 0.0, 128
        %531 = vxpose.xlu0.b32.cont [8/16] 0.0, 128
        %532 = vxpose.xlu0.b32.cont [9/16] 0.0, 128
        %533 = vxpose.xlu0.b32.cont [10/16] 0.0, 128
        %534 = vxpose.xlu0.b32.cont [11/16] 0.0, 128
        %535 = vxpose.xlu0.b32.cont [12/16] 0.0, 128
        %536 = vxpose.xlu0.b32.cont [13/16] 0.0, 128
        %537 = vxpose.xlu0.b32.cont [14/16] 0.0, 128
        %538 = vxpose.xlu0.b32.cont [15/16] 0.0, 128
        %539 = vxpose.xlu0.b32.end [16/16] 0.0, 128
        %v540 = vpop.trf.xlu0
        %v541 = vpop.trf.xlu0
        %v542 = vpop.trf.xlu0
        %v543 = vpop.trf.xlu0
        %v544 = vpop.trf.xlu0
        %v545 = vpop.trf.xlu0
        %v546 = vpop.trf.xlu0
        %v547 = vpop.trf.xlu0
        %v548 = vpop.trf.xlu0
        %v549 = vpop.trf.xlu0
        %v550 = vpop.trf.xlu0
        %v551 = vpop.trf.xlu0
        %v552 = vpop.trf.xlu0
        %v553 = vpop.trf.xlu0
        %v554 = vpop.trf.xlu0
        %v555 = vpop.trf.xlu0
        %v556 = vld [vmem:[#allocation7] sm:$0xff]
        %v557 = vld [vmem:[#allocation7 + $0x8] sm:$0xff]
        %v558 = vld [vmem:[%s3] sm:$0x1]
        %vm559 = vcmask 130048
        %v561 = vsel %vm559, %v540, 0
        %563 = vmatpush.msra.mxu0 0.0
        %564 = vmatpush.msra.mxu0 0.0
        %565 = vmatpush.msra.mxu0 0.0
        %566 = vmatpush.msra.mxu0 0.0
        %567 = vmatpush.msra.mxu0 0.0
        %568 = vmatpush.msra.mxu0 0.0
        %569 = vmatpush.msra.mxu0 0.0
        %570 = vmatpush.msra.mxu0 0.0
        %571 = vmatpush.msra.mxu0 0.0
        %572 = vmatpush.msra.mxu0 0.0
        %573 = vmatpush.msra.mxu0 0.0
        %574 = vmatpush.msra.mxu0 0.0
        %575 = vmatpush.msra.mxu0 0.0
        %576 = vmatpush.msra.mxu0 0.0
        %577 = vmatpush.msra.mxu0 %v557
        %578 = vmatpush.msra.mxu0 %v556
        %579 = vmatmul.f32.gmra.mxu0 %v561
        %v580 = vpop.f32.mrf.mxu0
        %v581 = vadd.f32 %v558, %v580
        %582 = vdwg.mxu0
        %583 = vxpose.xlu0.b32.start [1/16] %v520, 128
        %584 = vxpose.xlu0.b32.cont [2/16] %v523, 128
        %585 = vxpose.xlu0.b32.cont [3/16] 0.0, 128
        %586 = vxpose.xlu0.b32.cont [4/16] 0.0, 128
        %587 = vxpose.xlu0.b32.cont [5/16] 0.0, 128
        %588 = vxpose.xlu0.b32.cont [6/16] 0.0, 128
        %589 = vxpose.xlu0.b32.cont [7/16] 0.0, 128
        %590 = vxpose.xlu0.b32.cont [8/16] 0.0, 128
        %591 = vxpose.xlu0.b32.cont [9/16] 0.0, 128
        %592 = vxpose.xlu0.b32.cont [10/16] 0.0, 128
        %593 = vxpose.xlu0.b32.cont [11/16] 0.0, 128
        %594 = vxpose.xlu0.b32.cont [12/16] 0.0, 128
        %595 = vxpose.xlu0.b32.cont [13/16] 0.0, 128
        %596 = vxpose.xlu0.b32.cont [14/16] 0.0, 128
        %597 = vxpose.xlu0.b32.cont [15/16] 0.0, 128
        %598 = vxpose.xlu0.b32.end [16/16] 0.0, 128
        %v599 = vpop.trf.xlu0
        %v600 = vpop.trf.xlu0
        %v601 = vpop.trf.xlu0
        %v602 = vpop.trf.xlu0
        %v603 = vpop.trf.xlu0
        %v604 = vpop.trf.xlu0
        %v605 = vpop.trf.xlu0
        %v606 = vpop.trf.xlu0
        %v607 = vpop.trf.xlu0
        %v608 = vpop.trf.xlu0
        %v609 = vpop.trf.xlu0
        %v610 = vpop.trf.xlu0
        %v611 = vpop.trf.xlu0
        %v612 = vpop.trf.xlu0
        %v613 = vpop.trf.xlu0
        %v614 = vpop.trf.xlu0
        %v615 = vld [vmem:[#allocation8] sm:$0xff]
        %v616 = vld [vmem:[#allocation8 + $0x8] sm:$0xff]
        %v617 = vld [vmem:[%s5] sm:$0x1]
        %v619 = vsel %vm559, %v599, 0
        %621 = vmatpush.msra.mxu0 0.0
        %622 = vmatpush.msra.mxu0 0.0
        %623 = vmatpush.msra.mxu0 0.0
        %624 = vmatpush.msra.mxu0 0.0
        %625 = vmatpush.msra.mxu0 0.0
        %626 = vmatpush.msra.mxu0 0.0
        %627 = vmatpush.msra.mxu0 0.0
        %628 = vmatpush.msra.mxu0 0.0
        %629 = vmatpush.msra.mxu0 0.0
        %630 = vmatpush.msra.mxu0 0.0
        %631 = vmatpush.msra.mxu0 0.0
        %632 = vmatpush.msra.mxu0 0.0
        %633 = vmatpush.msra.mxu0 0.0
        %634 = vmatpush.msra.mxu0 0.0
        %635 = vmatpush.msra.mxu0 %v616
        %636 = vmatpush.msra.mxu0 %v615
        %637 = vmatmul.f32.gmra.mxu0 %v619
        %v638 = vpop.f32.mrf.mxu0
        %v639 = vadd.f32 %v617, %v638
        %640 = vdwg.mxu0
        %642 = vrot.lane.b32.xlu0 %v639, 16
        %v643 = vpop.permute.xlu0 %642
        %v645 = vsel %vm559, %v581, %v643
        %v646 = vld [vmem:[#allocation10] sm:$0xff]
        %v647 = vld [vmem:[#allocation10 + $0x8] sm:$0xff]
        %v648 = vld [vmem:[#allocation10 + $0x10] sm:$0xff]
        %v649 = vld [vmem:[#allocation10 + $0x18] sm:$0xff]
        %vm650 = vcmask 261120
        %v652 = vsel %vm650, %v645, 0
        %654 = vmatpush.msra.mxu0 0.0
        %655 = vmatpush.msra.mxu0 0.0
        %656 = vmatpush.msra.mxu0 0.0
        %657 = vmatpush.msra.mxu0 0.0
        %658 = vmatpush.msra.mxu0 0.0
        %659 = vmatpush.msra.mxu0 0.0
        %660 = vmatpush.msra.mxu0 0.0
        %661 = vmatpush.msra.mxu0 0.0
        %662 = vmatpush.msra.mxu0 0.0
        %663 = vmatpush.msra.mxu0 0.0
        %664 = vmatpush.msra.mxu0 0.0
        %665 = vmatpush.msra.mxu0 0.0
        %666 = vmatpush.msra.mxu0 %v649
        %667 = vmatpush.msra.mxu0 %v648
        %668 = vmatpush.msra.mxu0 %v647
        %669 = vmatpush.msra.mxu0 %v646
        %670 = vmatmul.f32.gmra.mxu0 %v652
        %v671 = vpop.f32.mrf.mxu0
        %v672 = vadd.f32 0.0, %v671
        %673 = vdwg.mxu0
        %675 = vrot.lane.b32.xlu0 %v672, 124
        %v676 = vpop.permute.xlu0 %675
        %v678 = vmax.f32 %v672, %v676
        %679 = vrot.lane.b32.xlu0 %v672, 120
        %v680 = vpop.permute.xlu0 %679
        %v682 = vmax.f32 %v678, %v680
        %683 = vrot.lane.b32.xlu0 %v672, 116
        %v684 = vpop.permute.xlu0 %683
        %v686 = vmax.f32 %v682, %v684
        %687 = vrot.lane.b32.xlu0 %v672, 112
        %v688 = vpop.permute.xlu0 %687
        %v690 = vmax.f32 %v686, %v688
        %691 = vrot.lane.b32.xlu0 %v672, 108
        %v692 = vpop.permute.xlu0 %691
        %v694 = vmax.f32 %v690, %v692
        %695 = vrot.lane.b32.xlu0 %v672, 104
        %v696 = vpop.permute.xlu0 %695
        %v698 = vmax.f32 %v694, %v696
        %699 = vrot.lane.b32.xlu0 %v672, 100
        %v700 = vpop.permute.xlu0 %699
        %v702 = vmax.f32 %v698, %v700
        %704 = vrot.lane.b32.xlu0 %v702, 96
        %v705 = vpop.permute.xlu0 %704
        %707 = vrot.lane.b32.xlu0 %v702, 100
        %v708 = vpop.permute.xlu0 %707
        %710 = vrot.lane.b32.xlu0 %v702, 104
        %v711 = vpop.permute.xlu0 %710
        %713 = vrot.lane.b32.xlu0 %v702, 108
        %v714 = vpop.permute.xlu0 %713
        %716 = vrot.lane.b32.xlu0 %v702, 112
        %v717 = vpop.permute.xlu0 %716
        %719 = vrot.lane.b32.xlu0 %v702, 116
        %v720 = vpop.permute.xlu0 %719
        %722 = vrot.lane.b32.xlu0 %v702, 120
        %v723 = vpop.permute.xlu0 %722
        %725 = vrot.lane.b32.xlu0 %v702, 124
        %v726 = vpop.permute.xlu0 %725
        %vm728 = vcmask 31744
        %v729 = vsel %vm728, %v705, %v708
        %vm730 = vcmask 64512
        %v731 = vsel %vm730, %v729, %v711
        %vm732 = vcmask 97280
        %v733 = vsel %vm732, %v731, %v714
        %v734 = vsel %vm559, %v733, %v717
        %vm735 = vcmask 162816
        %v736 = vsel %vm735, %v734, %v720
        %vm737 = vcmask 195584
        %v738 = vsel %vm737, %v736, %v723
        %vm739 = vcmask 228352
        %v740 = vsel %vm739, %v738, %v726
        %742 = vrot.lane.b32.xlu0 %v740, 32
        %v743 = vpop.permute.xlu0 %742
        %v745 = vsub.f32 %v672, %v743
        %v746 = vmul.f32 %v745, 1.442695
        %v747 = vpow.pop %v746
        %749 = vrot.lane.b32.xlu0 %v747, 124
        %v750 = vpop.permute.xlu0 %749
        %v752 = vadd.f32 %v747, %v750
        %753 = vrot.lane.b32.xlu0 %v747, 120
        %v754 = vpop.permute.xlu0 %753
        %v756 = vadd.f32 %v752, %v754
        %757 = vrot.lane.b32.xlu0 %v747, 116
        %v758 = vpop.permute.xlu0 %757
        %v760 = vadd.f32 %v756, %v758
        %761 = vrot.lane.b32.xlu0 %v747, 112
        %v762 = vpop.permute.xlu0 %761
        %v764 = vadd.f32 %v760, %v762
        %765 = vrot.lane.b32.xlu0 %v747, 108
        %v766 = vpop.permute.xlu0 %765
        %v768 = vadd.f32 %v764, %v766
        %769 = vrot.lane.b32.xlu0 %v747, 104
        %v770 = vpop.permute.xlu0 %769
        %v772 = vadd.f32 %v768, %v770
        %773 = vrot.lane.b32.xlu0 %v747, 100
        %v774 = vpop.permute.xlu0 %773
        %v776 = vadd.f32 %v772, %v774
        %778 = vrot.lane.b32.xlu0 %v776, 96
        %v779 = vpop.permute.xlu0 %778
        %781 = vrot.lane.b32.xlu0 %v776, 100
        %v782 = vpop.permute.xlu0 %781
        %784 = vrot.lane.b32.xlu0 %v776, 104
        %v785 = vpop.permute.xlu0 %784
        %787 = vrot.lane.b32.xlu0 %v776, 108
        %v788 = vpop.permute.xlu0 %787
        %790 = vrot.lane.b32.xlu0 %v776, 112
        %v791 = vpop.permute.xlu0 %790
        %793 = vrot.lane.b32.xlu0 %v776, 116
        %v794 = vpop.permute.xlu0 %793
        %796 = vrot.lane.b32.xlu0 %v776, 120
        %v797 = vpop.permute.xlu0 %796
        %799 = vrot.lane.b32.xlu0 %v776, 124
        %v800 = vpop.permute.xlu0 %799
        %v802 = vsel %vm728, %v779, %v782
        %v803 = vsel %vm730, %v802, %v785
        %v804 = vsel %vm732, %v803, %v788
        %v805 = vsel %vm559, %v804, %v791
        %v806 = vsel %vm735, %v805, %v794
        %v807 = vsel %vm737, %v806, %v797
        %v808 = vsel %vm739, %v807, %v800
        %810 = vrot.lane.b32.xlu0 %v808, 32
        %v811 = vpop.permute.xlu0 %810
        %v813 = vrcp.pop %v811
        %v814 = vmul.f32 %v811, %v813
        %v815 = vsub.f32 1.0, %v814
        %v816 = vmul.f32 %v813, %v815
        %v817 = vadd.f32 %v813, %v816
        %vm818 = vweird.f32 %v811
        %vm819 = vweird.f32 %v813
        %vm820 = vmor %vm818, %vm819
        %v821 = vsel %vm820, %v813, %v817
        %v822 = vand.u32 2147483647, %v811
        %vm823 = vcmp.eq.f32.partialorder %v822, 8.507059e+37
        %v824 = vand.u32 %v811, 2147483648
        %v825 = vor.u32 1.1754944e-38, %v824
        %v826 = vsel %vm823, %v825, %v821
        %v827 = vmul.f32 %v747, %v826
        %829 = vrot.lane.b32.xlu0 %v827, 96
        %v830 = vpop.permute.xlu0 %829
        %v832 = vmul.f32 %v672, %v830
        %v833 = vld [vmem:[#allocation13] sm:$0xff]
        %v834 = vld [vmem:[#allocation13 + $0x8] sm:$0xff]
        %v835 = vld [vmem:[#allocation13 + $0x10] sm:$0xff]
        %v836 = vld [vmem:[#allocation13 + $0x18] sm:$0xff]
        %v838 = vsel %vm650, %v832, 0
        %840 = vmatpush.msra.mxu0 0.0
        %841 = vmatpush.msra.mxu0 0.0
        %842 = vmatpush.msra.mxu0 0.0
        %843 = vmatpush.msra.mxu0 0.0
        %844 = vmatpush.msra.mxu0 0.0
        %845 = vmatpush.msra.mxu0 0.0
        %846 = vmatpush.msra.mxu0 0.0
        %847 = vmatpush.msra.mxu0 0.0
        %848 = vmatpush.msra.mxu0 0.0
        %849 = vmatpush.msra.mxu0 0.0
        %850 = vmatpush.msra.mxu0 0.0
        %851 = vmatpush.msra.mxu0 0.0
        %852 = vmatpush.msra.mxu0 %v836
        %853 = vmatpush.msra.mxu0 %v835
        %854 = vmatpush.msra.mxu0 %v834
        %855 = vmatpush.msra.mxu0 %v833
        %856 = vmatmul.f32.gmra.mxu0 %v838
        %v857 = vpop.f32.mrf.mxu0
        %v858 = vadd.f32 0.0, %v857
        %859 = vdwg.mxu0
        %v860 = vmul.f32 %v858, 0.35355338
        %861 = vrot.lane.b32.xlu0 %v672, 64
        %v862 = vpop.permute.xlu0 %861
        %v864 = vmul.f32 %v860, %v862
        %v865 = vld [vmem:[#allocation11] sm:$0xff]
        %v866 = vld [vmem:[#allocation11 + $0x8] sm:$0xff]
        %v867 = vld [vmem:[#allocation11 + $0x10] sm:$0xff]
        %v868 = vld [vmem:[#allocation11 + $0x18] sm:$0xff]
        %v869 = vld [vmem:[%s8] sm:$0x1]
        %v871 = vsel %vm650, %v864, 0
        %873 = vmatpush.msra.mxu0 0.0
        %874 = vmatpush.msra.mxu0 0.0
        %875 = vmatpush.msra.mxu0 0.0
        %876 = vmatpush.msra.mxu0 0.0
        %877 = vmatpush.msra.mxu0 0.0
        %878 = vmatpush.msra.mxu0 0.0
        %879 = vmatpush.msra.mxu0 0.0
        %880 = vmatpush.msra.mxu0 0.0
        %881 = vmatpush.msra.mxu0 0.0
        %882 = vmatpush.msra.mxu0 0.0
        %883 = vmatpush.msra.mxu0 0.0
        %884 = vmatpush.msra.mxu0 0.0
        %885 = vmatpush.msra.mxu0 %v868
        %886 = vmatpush.msra.mxu0 %v867
        %887 = vmatpush.msra.mxu0 %v866
        %888 = vmatpush.msra.mxu0 %v865
        %889 = vmatmul.f32.gmra.mxu0 %v871
        %v890 = vpop.f32.mrf.mxu0
        %v891 = vadd.f32 %v869, %v890
        %892 = vdwg.mxu0
        %893 = vxpose.xlu0.b32.start [1/16] %v891, 128
        %894 = vxpose.xlu0.b32.cont [2/16] 0.0, 128
        %895 = vxpose.xlu0.b32.cont [3/16] 0.0, 128
        %896 = vxpose.xlu0.b32.cont [4/16] 0.0, 128
        %897 = vxpose.xlu0.b32.cont [5/16] 0.0, 128
        %898 = vxpose.xlu0.b32.cont [6/16] 0.0, 128
        %899 = vxpose.xlu0.b32.cont [7/16] 0.0, 128
        %900 = vxpose.xlu0.b32.cont [8/16] 0.0, 128
        %901 = vxpose.xlu0.b32.cont [9/16] 0.0, 128
        %902 = vxpose.xlu0.b32.cont [10/16] 0.0, 128
        %903 = vxpose.xlu0.b32.cont [11/16] 0.0, 128
        %904 = vxpose.xlu0.b32.cont [12/16] 0.0, 128
        %905 = vxpose.xlu0.b32.cont [13/16] 0.0, 128
        %906 = vxpose.xlu0.b32.cont [14/16] 0.0, 128
        %907 = vxpose.xlu0.b32.cont [15/16] 0.0, 128
        %908 = vxpose.xlu0.b32.end [16/16] 0.0, 128
        %v909 = vpop.trf.xlu0
        %v910 = vpop.trf.xlu0
        %v911 = vpop.trf.xlu0
        %v912 = vpop.trf.xlu0
        %v913 = vpop.trf.xlu0
        %v914 = vpop.trf.xlu0
        %v915 = vpop.trf.xlu0
        %v916 = vpop.trf.xlu0
        %v917 = vpop.trf.xlu0
        %v918 = vpop.trf.xlu0
        %v919 = vpop.trf.xlu0
        %v920 = vpop.trf.xlu0
        %v921 = vpop.trf.xlu0
        %v922 = vpop.trf.xlu0
        %v923 = vpop.trf.xlu0
        %v924 = vpop.trf.xlu0
        %926 = vrot.lane.b32.xlu0 %v891, 112
        %v927 = vpop.permute.xlu0 %926
        %929 = vxpose.xlu0.b32.start [1/16] %v927, 128
        %930 = vxpose.xlu0.b32.cont [2/16] 0.0, 128
        %931 = vxpose.xlu0.b32.cont [3/16] 0.0, 128
        %932 = vxpose.xlu0.b32.cont [4/16] 0.0, 128
        %933 = vxpose.xlu0.b32.cont [5/16] 0.0, 128
        %934 = vxpose.xlu0.b32.cont [6/16] 0.0, 128
        %935 = vxpose.xlu0.b32.cont [7/16] 0.0, 128
        %936 = vxpose.xlu0.b32.cont [8/16] 0.0, 128
        %937 = vxpose.xlu0.b32.cont [9/16] 0.0, 128
        %938 = vxpose.xlu0.b32.cont [10/16] 0.0, 128
        %939 = vxpose.xlu0.b32.cont [11/16] 0.0, 128
        %940 = vxpose.xlu0.b32.cont [12/16] 0.0, 128
        %941 = vxpose.xlu0.b32.cont [13/16] 0.0, 128
        %942 = vxpose.xlu0.b32.cont [14/16] 0.0, 128
        %943 = vxpose.xlu0.b32.cont [15/16] 0.0, 128
        %944 = vxpose.xlu0.b32.end [16/16] 0.0, 128
        %v945 = vpop.trf.xlu0
        %v946 = vpop.trf.xlu0
        %v947 = vpop.trf.xlu0
        %v948 = vpop.trf.xlu0
        %v949 = vpop.trf.xlu0
        %v950 = vpop.trf.xlu0
        %v951 = vpop.trf.xlu0
        %v952 = vpop.trf.xlu0
        %v953 = vpop.trf.xlu0
        %v954 = vpop.trf.xlu0
        %v955 = vpop.trf.xlu0
        %v956 = vpop.trf.xlu0
        %v957 = vpop.trf.xlu0
        %v958 = vpop.trf.xlu0
        %v959 = vpop.trf.xlu0
        %v960 = vpop.trf.xlu0
        %v961 = vadd.f32 %v909, 1.0
        %v962 = vadd.f32 %v910, 1.0
        %964 = vset.pattern.permute.xlu0 0
        %965 = vperm.xlu0 %964, %v961
        %v966 = vpop.permute.xlu0 %965
        %969 = vset.pattern.permute.xlu0 0
        %970 = vperm.xlu0 %969, %v962
        %v971 = vpop.permute.xlu0 %970
        %v973 = vmul.f32 %v966, %v504
        %v974 = vmul.f32 %v966, %v505
        %v975 = vmul.f32 %v971, %v506
        %v976 = vmul.f32 %v971, %v507
        %v977 = vadd.f32 %v945, 1.0
        %v978 = vadd.f32 %v946, 1.0
        %980 = vset.pattern.permute.xlu0 0
        %981 = vperm.xlu0 %980, %v977
        %v982 = vpop.permute.xlu0 %981
        %985 = vset.pattern.permute.xlu0 0
        %986 = vperm.xlu0 %985, %v978
        %v987 = vpop.permute.xlu0 %986
        %v989 = vmul.f32 %v982, %v508
        %v990 = vmul.f32 %v982, %v509
        %v991 = vmul.f32 %v987, %v510
        %v992 = vmul.f32 %v987, %v511
        %v993 = vadd.f32 %v973, %v989
        %v994 = vadd.f32 %v974, %v990
        %v995 = vadd.f32 %v975, %v991
        %v996 = vadd.f32 %v976, %v992
        %997 = vst [vmem:[%s503] sm:$0xff] %v993
        %998 = vst [vmem:[%s503 + $0x8] sm:$0xff] %v994
        %999 = vst [vmem:[%s503 + $0x10] sm:$0xff] %v995
        %1000 = vst [vmem:[%s503 + $0x18] sm:$0xff] %v996
        %s1001 = sand.u32 %s260, 1
        %s1002 = scalar_lea.sflag [#allocation4], %s1001
        %s1003 = sand.u32 %s260, 1
        %s1004 = smul.addr %s1003, 32
        %s1005 = scalar_lea.vmem [#allocation14], %s1004
        // Predicated region
        $region89: #{tpu_custom_call.1} parent=59 // pred_check
          %p1006 = pneg %p270
        $region90: #{tpu_custom_call.1} parent=59 // pred_check_branch
          %1008 = sbr.rel (%p1006) target = $region92
        $region91: #{tpu_custom_call.1} parent=59 // pred_region
          %1010 = vsyncadd %s1002, 0
          %s1011 = smul.addr %s32, 4
          %s1012 = smul.addr %s1011, 8
          %s1013 = scalar_lea.hbm %s10, %s1012
          %s1014 = sshll.u32 %s1005, 4
          %s1015 = int_to_ptr.vmem [resolvable:$true] %s1014
          %s1016 = sshll.u32 %s1013, 4
          %s1017 = int_to_ptr.hbm [resolvable:$true] %s1016
          %1022 = dma.vmem_to_hbm [thread:$0]  %s1015, 512, %s1017, %s1002, 256, 256, 16
        $region92: #{tpu_custom_call.1} parent=59 // pred_fallthru
          _
      $region60: #{tpu_custom_call.1} parent=5 // pred_fallthru
        _
      %p1023 = scmp.le.s32.totalorder 2, %s27
      // Predicated region
      $region93: #{tpu_custom_call.1} parent=5 // pred_check
        %p1024 = pneg %p1023
      $region94: #{tpu_custom_call.1} parent=5 // pred_check_branch
        %1026 = sbr.rel (%p1024) target = $region96
      $region95: #{tpu_custom_call.1} parent=5 // pred_region
        %s1027 = ssub.s32 %s27, 2
        // Predicated region
        $region97: #{tpu_custom_call.1} parent=95 // pred_check
          %p1028 = pneg %p276
        $region98: #{tpu_custom_call.1} parent=95 // pred_check_branch
          %1030 = sbr.rel (%p1028) target = $region100
        $region99: #{tpu_custom_call.1} parent=95 // pred_region
          %s1031 = sand.u32 %s261, 1
          %s1032 = scalar_lea.sflag [#allocation4], %s1031
          %s1033 = sand.u32 %s261, 1
          %s1034 = smul.addr %s1033, 32
          %s1035 = scalar_lea.vmem [#allocation14], %s1034
          %1037 = dma.done %s1032, 512
        $region100: #{tpu_custom_call.1} parent=95 // pred_fallthru
          _
      $region96: #{tpu_custom_call.1} parent=5 // pred_fallthru
        _
    $region6: #{tpu_custom_call.1} parent=1 // loop_footer
      %s31 = sadd.s32 1, %s27
    $region7: #{tpu_custom_call.1} parent=1 // loop_footer_branch
      %26 = sbr.rel target = $region3
    $region8: #{tpu_custom_call.1} parent=1 // loop_exit
      _
    %1038 = vsyncpa [#allocation3], 1
    %s1039 = scalar_lea.sflag [#allocation3], 1
    %1040 = vsyncpa %s1039, 1
    %1041 = vsyncpa [#allocation6], 1
    %s1042 = scalar_lea.sflag [#allocation6], 1
    %1043 = vsyncpa %s1042, 1
    %1044 = vsyncpa [#allocation9], 1
    %1045 = vsyncpa [#allocation12], 1
    %1046 = vsyncpa [#allocation4], 1
    %s1047 = scalar_lea.sflag [#allocation4], 1
    %1048 = vsyncpa %s1047, 1

</llo_original>
